<compile_context>
chip_gen: v7x
topology: tpu7x:2x2x1
jax: 0.10.0
libtpu: 0.0.40
codegen_flags: <defaults>
</compile_context>

<pallas_src>
import jax
import jax.numpy as jnp
from jax.experimental import pallas as pl
from jax.experimental.pallas import tpu as pltpu

# False -> modern torch_geometric (>=2.0) HypergraphConv: hyperedge weights only
#          enter the node-degree normalization D.
# True  -> documented formula / older PyG: X' = D^-1 H W B^-1 H^T X Θ.
EDGE_WEIGHT_ON_B = False


def _round_up(v, m):
    return (v + m - 1) // m * m


def _hypergraph_conv_kernel(x_ref, prop_ref, theta_ref, bias_ref, o_ref):
    Bt, Np, Cin = x_ref.shape
    Cout = theta_ref.shape[1]

    theta = theta_ref[...]          # (Cin, Cout_pad)  bf16
    prop = prop_ref[...]            # (Np, Np)         bf16  (batch-invariant)
    bias = bias_ref[...]            # (1, Cout_pad)    f32

    # X Θ for all Bt samples in one MXU matmul (fold batch into the M-dim).
    xw = jnp.dot(x_ref[...].reshape(Bt * Np, Cin), theta,
                 preferred_element_type=jnp.float32)          # (Bt*Np, Cout_pad) f32
    xw = xw.reshape(Bt, Np, Cout).astype(jnp.bfloat16)

    # Per-sample propagation: out_b = relu(M @ (x_b Θ) + bias).
    # Bt is a small static block size -> this Python loop fully unrolls.
    for b in range(Bt):
        node = jnp.dot(prop, xw[b], preferred_element_type=jnp.float32)  # (Np, Cout_pad) f32
        o_ref[b] = jnp.maximum(node + bias, 0.0)


def batched_hypergraph_conv(x, edge_index, edge_weight, num_nodes, num_edges,
                            theta, bias, *, block_batch=8):
    """Equivalent of BatchedHypergraphConv.forward.

    x:           (B, N, C_in)  float32
    edge_index:  (2, num_connections) int32   -- [node_idx; hyperedge_idx]
    edge_weight: (num_edges,)  float32        -- per-hyperedge weight (as PyG expects)
    """
    Bsz, N, Cin = x.shape
    Cout = theta.shape[1]
    assert N == num_nodes

    # ---------- batch-invariant precompute (hoisted out of the kernel) ----------
    row, col = edge_index
    H = jnp.zeros((num_nodes, num_edges), jnp.float32).at[row, col].add(1.0)
    w = edge_weight.astype(jnp.float32)                         # (E,)
    deg_e = jnp.sum(H, axis=0)                                  # hyperedge degree B_e
    binv = jnp.where(deg_e > 0, 1.0 / deg_e, 0.0)
    scale_e = binv * w if EDGE_WEIGHT_ON_B else binv            # (E,)
    d = H @ w                                                   # weighted node degree D_v
    dinv = jnp.where(d > 0, 1.0 / d, 0.0)                       # (N,)
    # Batch-invariant propagation matrix  M = D^-1 H diag(s) H^T   (N, N), f32.
    prop = (dinv[:, None] * (H * scale_e[None, :])) @ H.T

    # ---------- TPU-friendly padding / blocking ----------
    Bt = max(1, min(block_batch, Bsz))          # samples per grid step
    B_pad = _round_up(Bsz, Bt)
    N_pad = _round_up(N, 8)                     # sublane alignment
    Cout_pad = _round_up(Cout, 128)             # lane-dense output stores

    x_p = jnp.zeros((B_pad, N_pad, Cin), jnp.bfloat16).at[:Bsz, :N, :].set(
        x.astype(jnp.bfloat16))
    prop_p = jnp.zeros((N_pad, N_pad), jnp.bfloat16).at[:N, :N].set(
        prop.astype(jnp.bfloat16))
    theta_p = jnp.zeros((Cin, Cout_pad), jnp.bfloat16).at[:, :Cout].set(
        theta.astype(jnp.bfloat16))
    bias_p = jnp.zeros((1, Cout_pad), jnp.float32).at[0, :Cout].set(
        bias.astype(jnp.float32))

    grid = (B_pad // Bt,)
    flops = int(B_pad) * (2 * N_pad * Cin * Cout_pad + 2 * N_pad * N_pad * Cout_pad)
    bytes_accessed = (x_p.size * 2 + prop_p.size * 2 + theta_p.size * 2
                      + bias_p.size * 4 + B_pad * N_pad * Cout_pad * 4)

    out = pl.pallas_call(
        _hypergraph_conv_kernel,
        out_shape=jax.ShapeDtypeStruct((B_pad, N_pad, Cout_pad), jnp.float32),
        grid_spec=pltpu.PrefetchScalarGridSpec(
            num_scalar_prefetch=0,
            grid=grid,
            in_specs=[
                pl.BlockSpec((Bt, N_pad, Cin), lambda i: (i, 0, 0)),      # x (bf16)
                pl.BlockSpec((N_pad, N_pad), lambda i: (0, 0)),           # M (bf16)
                pl.BlockSpec((Cin, Cout_pad), lambda i: (0, 0)),          # theta (bf16)
                pl.BlockSpec((1, Cout_pad), lambda i: (0, 0)),            # bias (f32)
            ],
            out_specs=pl.BlockSpec((Bt, N_pad, Cout_pad), lambda i: (i, 0, 0)),
        ),
        compiler_params=pltpu.CompilerParams(
            dimension_semantics=("parallel",),          # 2x on v7x megacore
            vmem_limit_bytes=32 * 1024 * 1024,
        ),
        cost_estimate=pl.CostEstimate(
            flops=flops, transcendentals=0, bytes_accessed=int(bytes_accessed)),
    )(x_p, prop_p, theta_p, bias_p)

    return out[:Bsz, :N, :Cout]


def reference(x, edge_index, edge_weight, num_nodes, num_edges, theta, bias):
    """Pure-JAX scatter-based f32 reference mirroring the PyTorch/PyG code path
    (build_batch_edge_index_and_weight + HypergraphConv + relu)."""
    Bsz, N, Cin = x.shape
    row, col = edge_index
    rows = jnp.concatenate([row + b * num_nodes for b in range(Bsz)])
    cols = jnp.concatenate([col + b * num_edges for b in range(Bsz)])
    w_edge = jnp.tile(edge_weight, Bsz)          # batched hyperedge weights
    n_tot, e_tot = Bsz * num_nodes, Bsz * num_edges

    xf = x.reshape(Bsz * N, Cin) @ theta
    D = jax.ops.segment_sum(w_edge[cols], rows, n_tot)
    Dinv = jnp.where(D > 0, 1.0 / D, 0.0)
    deg = jax.ops.segment_sum(jnp.ones(cols.shape, xf.dtype), cols, e_tot)
    Binv = jnp.where(deg > 0, 1.0 / deg, 0.0)
    norm_e = Binv * w_edge if EDGE_WEIGHT_ON_B else Binv
    edge_feat = jax.ops.segment_sum(norm_e[cols][:, None] * xf[rows], cols, e_tot)
    out = jax.ops.segment_sum(Dinv[rows][:, None] * edge_feat[cols], rows, n_tot)
    out = jnp.maximum(out + bias[None, :], 0.0)
    return out.reshape(Bsz, N, -1)


if __name__ == "__main__":
    key = jax.random.PRNGKey(0)
    k1, k2, k3, k4, k5, k6 = jax.random.split(key, 6)

    Bsz, N, E, Cin, Cout, nconn = 2, 16, 8, 8, 16, 24

    x = jax.random.normal(k1, (Bsz, N, Cin), jnp.float32)
    # hypergraph connectivity: nconn (node, hyperedge) incidences; every hyperedge
    # id 0..E-1 appears at least once so num_edges inference matches PyG.
    row = jax.random.randint(k2, (nconn,), 0, N, dtype=jnp.int32)
    col = jnp.concatenate(
        [jnp.arange(E, dtype=jnp.int32),
         jax.random.randint(k3, (nconn - E,), 0, E, dtype=jnp.int32)])
    edge_index = jnp.stack([row, col])
    # per-hyperedge weights (length num_edges), as HypergraphConv expects
    edge_weight = jax.random.uniform(k4, (E,), jnp.float32, 0.5, 1.5)

    # deterministic synthetic parameters (HypergraphConv: lin weight + bias)
    theta = jax.random.normal(k5, (Cin, Cout), jnp.float32) / jnp.sqrt(float(Cin))
    bias = 0.1 * jax.random.normal(k6, (Cout,), jnp.float32)

    out = batched_hypergraph_conv(x, edge_index, edge_weight, N, E, theta, bias)
    out = jax.block_until_ready(out)

    ref = reference(x, edge_index, edge_weight, N, E, theta, bias)
    # Matmul operands are bf16 (f32 accumulation), so compare with bf16-level tolerance.
    if not jnp.allclose(out, ref, rtol=2e-2, atol=2e-2):
        max_err = float(jnp.max(jnp.abs(out - ref)))
        raise AssertionError(f"Pallas kernel does not match reference; max|err|={max_err}")

    print("KERNEL_OK")
</pallas_src>

<mosaic_0001>
module attributes {stable_mosaic.version = 11 : i64} {
  func.func @_hypergraph_conv_kernel(%arg0: i32, %arg1: memref<2x16x8xbf16, #tpu.memory_space<vmem>>, %arg2: memref<16x16xbf16, #tpu.memory_space<vmem>>, %arg3: memref<8x128xbf16, #tpu.memory_space<vmem>>, %arg4: memref<1x128xf32, #tpu.memory_space<vmem>>, %arg5: memref<2x16x128xf32, #tpu.memory_space<vmem>>) attributes {dimension_semantics = [#tpu.dimension_semantics<parallel>], iteration_bounds = array<i64: 1>, scalar_prefetch = 0 : i64, scratch_operands = 0 : i64, tpu.core_type = #tpu.core_type<tc>, window_params = [{transform_indices = @transform_0, window_bounds = array<i64: 2, 16, 8>}, {pipeline_mode = #tpu.pipeline_mode<synchronous>, transform_indices = @transform_1, window_bounds = array<i64: 16, 16>}, {pipeline_mode = #tpu.pipeline_mode<synchronous>, transform_indices = @transform_2, window_bounds = array<i64: 8, 128>}, {pipeline_mode = #tpu.pipeline_mode<synchronous>, transform_indices = @transform_3, window_bounds = array<i64: 1, 128>}, {transform_indices = @transform_4, window_bounds = array<i64: 2, 16, 128>}]} {
    %c0 = arith.constant 0 : index
    %c0_0 = arith.constant 0 : index
    %0 = vector.load %arg3[%c0, %c0_0] : memref<8x128xbf16, #tpu.memory_space<vmem>>, vector<8x128xbf16>
    %c0_1 = arith.constant 0 : index
    %c0_2 = arith.constant 0 : index
    %1 = vector.load %arg2[%c0_1, %c0_2] : memref<16x16xbf16, #tpu.memory_space<vmem>>, vector<16x16xbf16>
    %c0_3 = arith.constant 0 : index
    %c0_4 = arith.constant 0 : index
    %2 = vector.load %arg4[%c0_3, %c0_4] : memref<1x128xf32, #tpu.memory_space<vmem>>, vector<1x128xf32>
    %c0_5 = arith.constant 0 : index
    %c0_6 = arith.constant 0 : index
    %c0_7 = arith.constant 0 : index
    %3 = vector.load %arg1[%c0_5, %c0_6, %c0_7] : memref<2x16x8xbf16, #tpu.memory_space<vmem>>, vector<2x16x8xbf16>
    %4 = vector.shape_cast %3 : vector<2x16x8xbf16> to vector<32x8xbf16>
    %cst = arith.constant dense<0.000000e+00> : vector<32x128xf32>
    %5 = tpu.matmul %4, %0, %cst {dimension_numbers = #tpu.dot_dimension_numbers<[1], [0], [0], [1], [0, 0, 1, 1], [], []>} : vector<32x8xbf16>, vector<8x128xbf16>, vector<32x128xf32> -> vector<32x128xf32>
    %6 = vector.shape_cast %5 : vector<32x128xf32> to vector<2x16x128xf32>
    %7 = arith.truncf %6 : vector<2x16x128xf32> to vector<2x16x128xbf16>
    %8 = vector.extract_strided_slice %7 {offsets = [0, 0, 0], sizes = [1, 16, 128], strides = [1, 1, 1]} : vector<2x16x128xbf16> to vector<1x16x128xbf16>
    %9 = vector.shape_cast %8 : vector<1x16x128xbf16> to vector<16x128xbf16>
    %cst_8 = arith.constant dense<0.000000e+00> : vector<16x128xf32>
    %10 = tpu.matmul %1, %9, %cst_8 {dimension_numbers = #tpu.dot_dimension_numbers<[1], [0], [0], [1], [0, 0, 1, 1], [], []>} : vector<16x16xbf16>, vector<16x128xbf16>, vector<16x128xf32> -> vector<16x128xf32>
    %11 = vector.broadcast %2 : vector<1x128xf32> to vector<16x128xf32>
    %12 = arith.addf %10, %11 : vector<16x128xf32>
    %cst_9 = arith.constant 0.000000e+00 : f32
    %13 = vector.broadcast %cst_9 : f32 to vector<16x128xf32>
    %14 = arith.maximumf %12, %13 : vector<16x128xf32>
    %c0_10 = arith.constant 0 : index
    %c0_11 = arith.constant 0 : index
    %c0_12 = arith.constant 0 : index
    %15 = vector.load %arg5[%c0_10, %c0_11, %c0_12] : memref<2x16x128xf32, #tpu.memory_space<vmem>>, vector<1x16x128xf32>
    %16 = vector.shape_cast %15 : vector<1x16x128xf32> to vector<16x128xf32>
    %17 = vector.shape_cast %14 : vector<16x128xf32> to vector<1x16x128xf32>
    tpu.vector_store %arg5[%c0_10, %c0_11, %c0_12], %17 {strides = array<i32>} : memref<2x16x128xf32, #tpu.memory_space<vmem>>, vector<1x16x128xf32>,
    %18 = vector.extract_strided_slice %7 {offsets = [1, 0, 0], sizes = [1, 16, 128], strides = [1, 1, 1]} : vector<2x16x128xbf16> to vector<1x16x128xbf16>
    %19 = vector.shape_cast %18 : vector<1x16x128xbf16> to vector<16x128xbf16>
    %cst_13 = arith.constant dense<0.000000e+00> : vector<16x128xf32>
    %20 = tpu.matmul %1, %19, %cst_13 {dimension_numbers = #tpu.dot_dimension_numbers<[1], [0], [0], [1], [0, 0, 1, 1], [], []>} : vector<16x16xbf16>, vector<16x128xbf16>, vector<16x128xf32> -> vector<16x128xf32>
    %21 = vector.broadcast %2 : vector<1x128xf32> to vector<16x128xf32>
    %22 = arith.addf %20, %21 : vector<16x128xf32>
    %cst_14 = arith.constant 0.000000e+00 : f32
    %23 = vector.broadcast %cst_14 : f32 to vector<16x128xf32>
    %24 = arith.maximumf %22, %23 : vector<16x128xf32>
    %c1 = arith.constant 1 : index
    %c0_15 = arith.constant 0 : index
    %c0_16 = arith.constant 0 : index
    %25 = vector.load %arg5[%c1, %c0_15, %c0_16] : memref<2x16x128xf32, #tpu.memory_space<vmem>>, vector<1x16x128xf32>
    %26 = vector.shape_cast %25 : vector<1x16x128xf32> to vector<16x128xf32>
    %27 = vector.shape_cast %24 : vector<16x128xf32> to vector<1x16x128xf32>
    tpu.vector_store %arg5[%c1, %c0_15, %c0_16], %27 {strides = array<i32>} : memref<2x16x128xf32, #tpu.memory_space<vmem>>, vector<1x16x128xf32>,
    return
  }
  func.func @transform_0(%arg0: i32) -> (i32, i32, i32) {
    %c0_i32 = arith.constant 0 : i32
    %c0_i32_0 = arith.constant 0 : i32
    %c0_i32_1 = arith.constant 0 : i32
    return %arg0, %c0_i32, %c0_i32_0 : i32, i32, i32
  }
  func.func @transform_1(%arg0: i32) -> (i32, i32) {
    %c0_i32 = arith.constant 0 : i32
    %c0_i32_0 = arith.constant 0 : i32
    %c0_i32_1 = arith.constant 0 : i32
    return %c0_i32, %c0_i32_0 : i32, i32
  }
  func.func @transform_2(%arg0: i32) -> (i32, i32) {
    %c0_i32 = arith.constant 0 : i32
    %c0_i32_0 = arith.constant 0 : i32
    %c0_i32_1 = arith.constant 0 : i32
    return %c0_i32, %c0_i32_0 : i32, i32
  }
  func.func @transform_3(%arg0: i32) -> (i32, i32) {
    %c0_i32 = arith.constant 0 : i32
    %c0_i32_0 = arith.constant 0 : i32
    %c0_i32_1 = arith.constant 0 : i32
    return %c0_i32, %c0_i32_0 : i32, i32
  }
  func.func @transform_4(%arg0: i32) -> (i32, i32, i32) {
    %c0_i32 = arith.constant 0 : i32
    %c0_i32_0 = arith.constant 0 : i32
    %c0_i32_1 = arith.constant 0 : i32
    return %arg0, %c0_i32, %c0_i32_0 : i32, i32, i32
  }
}

</mosaic_0001>

<llo_original>
// kernel: tpu_custom_call.1
$region0: #{tpu_custom_call.1}
  #allocation0 [shape = 'u32[]', space=smem, size = 0x4, offset = 0x4, fixed_abs, tag = 'smem constant byte address 0x4 - core index']
  #allocation1 [shape = 'u32[144,128]{1,0:T(1,128)}', space=vmem, size = 0x12000, scoped, tag = 'internal scratch']
  %s0 = inlined_call_operand.vmem [shape: bf16[2,16,8], index: 0, kind: input, shape index: {}]
  %s1 = inlined_call_operand.vmem [shape: bf16[16,16], index: 1, kind: input, shape index: {}]
  %s2 = inlined_call_operand.vmem [shape: bf16[8,128], index: 2, kind: input, shape index: {}]
  %s3 = inlined_call_operand.vmem [shape: f32[1,128], index: 3, kind: input, shape index: {}]
  %s4 = inlined_call_operand.hbm [shape: f32[2,16,128], index: 4, kind: output, shape index: {}]
  %s5 = sld [smem:[#allocation0]]
  $region26: #{tpu_custom_call.1} parent=0
    _
  %s7 = ssub.s32 1, %s5
  %s8 = scalar_select 0, %s7, %s5
  $region1: #{tpu_custom_call.1} parent=0
    #allocation2 [shape = 'u8[16384]{0}', space=vmem, size = 0x4000, scoped, tag = 'output window, operand 0, single buffered']
    #allocation3 [shape = 's32[1]{0}', space=sflag, size = 0x4, scoped, tag = 'scoped memory for tpu_custom_call.1']
    %9 = vsyncpa [#allocation3], 0
    // Predicated region
    $region2: #{tpu_custom_call.1} parent=1 // pred_check
      _
    $region3: #{tpu_custom_call.1} parent=1 // pred_check_branch
      %11 = sbr.rel (0) target = $region5
    $region4: #{tpu_custom_call.1} parent=1 // pred_region
      _
    $region5: #{tpu_custom_call.1} parent=1 // pred_fallthru
      _
    // Predicated region
    $region6: #{tpu_custom_call.1} parent=1 // pred_check
      _
    $region7: #{tpu_custom_call.1} parent=1 // pred_check_branch
      %13 = sbr.rel (0) target = $region9
    $region8: #{tpu_custom_call.1} parent=1 // pred_region
      _
    $region9: #{tpu_custom_call.1} parent=1 // pred_fallthru
      _
    // Predicated region
    $region10: #{tpu_custom_call.1} parent=1 // pred_check
      _
    $region11: #{tpu_custom_call.1} parent=1 // pred_check_branch
      %15 = sbr.rel (0) target = $region13
    $region12: #{tpu_custom_call.1} parent=1 // pred_region
      _
    $region13: #{tpu_custom_call.1} parent=1 // pred_fallthru
      _
    // Predicated region
    $region14: #{tpu_custom_call.1} parent=1 // pred_check
      _
    $region15: #{tpu_custom_call.1} parent=1 // pred_check_branch
      %17 = sbr.rel (0) target = $region17
    $region16: #{tpu_custom_call.1} parent=1 // pred_region
      _
    $region17: #{tpu_custom_call.1} parent=1 // pred_fallthru
      _
    %v19 = vld [vmem:[%s2] sm:$0xf]
    %v20 = vld [vmem:[%s1] sm:$0xf]
    %v21 = vld [vmem:[%s1 + $0x4] sm:$0xf]
    %v22 = vld [vmem:[%s3] sm:$0x1]
    %v23 = vld [vmem:[%s0] sm:$0xf]
    %v24 = vld [vmem:[%s0 + $0x4] sm:$0xf]
    %v25 = vld [vmem:[%s0 + $0x8] sm:$0xf]
    %v26 = vld [vmem:[%s0 + $0xc] sm:$0xf]
    %v31 = vunpack.c.l.b16 %v23
    %v32 = vunpack.c.l.b16 %v24
    %v33 = vunpack.c.l.b16 %v25
    %v34 = vunpack.c.l.b16 %v26
    %v35 = vpack.c.b16 %v32, %v31
    %v36 = vpack.c.b16 %v34, %v33
    %vm37 = vcmask 64512
    %v39 = vsel %vm37, %v35, 0
    %v42 = vsel %vm37, %v36, 0
    %vm44 = vcmask 1043456
    %v46 = vsel %vm44, %v19, 0
    %48 = vmatprep.subr.bf16.mxu0 0
    %49 = vmatpush1.bf16.msra.mxu0 %v46
    %50 = vmatprep.subr.bf16.mxu0 0
    %51 = vmatpush1.bf16.msra.mxu0 0
    %52 = vmatprep.subr.bf16.mxu0 0
    %53 = vmatpush1.bf16.msra.mxu0 0
    %54 = vmatprep.subr.bf16.mxu0 0
    %55 = vmatpush1.bf16.msra.mxu0 0
    %56 = vmatprep.subr.bf16.mxu0 0
    %57 = vmatpush1.bf16.msra.mxu0 0
    %58 = vmatprep.subr.bf16.mxu0 0
    %59 = vmatpush1.bf16.msra.mxu0 0
    %60 = vmatprep.subr.bf16.mxu0 0
    %61 = vmatpush1.bf16.msra.mxu0 0
    %62 = vmatprep.subr.bf16.mxu0 0
    %63 = vmatpush1.bf16.msra.mxu0 0
    %64 = vmatprep.subr.bf16.mxu0 0
    %65 = vmatpush1.bf16.msra.mxu0 0
    %66 = vmatprep.subr.bf16.mxu0 0
    %67 = vmatpush1.bf16.msra.mxu0 0
    %68 = vmatprep.subr.bf16.mxu0 0
    %69 = vmatpush1.bf16.msra.mxu0 0
    %70 = vmatprep.subr.bf16.mxu0 0
    %71 = vmatpush1.bf16.msra.mxu0 0
    %72 = vmatprep.subr.bf16.mxu0 0
    %73 = vmatpush1.bf16.msra.mxu0 0
    %74 = vmatprep.subr.bf16.mxu0 0
    %75 = vmatpush1.bf16.msra.mxu0 0
    %76 = vmatprep.subr.bf16.mxu0 0
    %77 = vmatpush1.bf16.msra.mxu0 0
    %78 = vmatprep.subr.bf16.mxu0 0
    %79 = vmatpush1.bf16.msra.mxu0 0
    %80 = vmatprep.mubr.bf16.mxu0 0
    %81 = vmatmul.mubr.bf16.gmra.mrb[0].mxu0 %v39
    %v82 = vpop.f32.mrb[0].mxu0
    %v83 = vadd.f32 0.0, %v82
    %v84 = vpop.f32.mrb[0].mxu0
    %v85 = vpop.f32.mrb[0].mxu0
    %v86 = vadd.f32 0.0, %v85
    %v87 = vpop.f32.mrb[0].mxu0
    %88 = vmatprep.mubr.bf16.mxu0 0
    %89 = vmatmul.mubr.bf16.gmra.mrb[0].mxu0 %v42
    %v90 = vpop.f32.mrb[0].mxu0
    %v91 = vadd.f32 0.0, %v90
    %v92 = vpop.f32.mrb[0].mxu0
    %v93 = vpop.f32.mrb[0].mxu0
    %v94 = vadd.f32 0.0, %v93
    %v95 = vpop.f32.mrb[0].mxu0
    %96 = vdwg.mxu0
    %v97 = vpack.c.bf16 %v86, %v83
    %v98 = vpack.c.bf16 %v94, %v91
    %v100 = vlaneseq
    %v101 = vshrl.u32 %v100, 7
    %v102 = vsub.s32 0, %v101
    %v103 = vrot.slane %v22, %v102
    %v107 = vunpack.c.l.b16 %v20
    %v108 = vunpack.c.l.b16 %v21
    %v109 = vpack.c.b16 %v108, %v107
    %vm110 = vcmask 130048
    %v112 = vsel %vm110, %v109, 0
    %114 = vmatprep.subr.bf16.mxu0 0
    %115 = vmatpush1.bf16.msra.mxu0 %v97
    %116 = vmatprep.subr.bf16.mxu0 0
    %117 = vmatpush1.bf16.msra.mxu0 0
    %118 = vmatprep.subr.bf16.mxu0 0
    %119 = vmatpush1.bf16.msra.mxu0 0
    %120 = vmatprep.subr.bf16.mxu0 0
    %121 = vmatpush1.bf16.msra.mxu0 0
    %122 = vmatprep.subr.bf16.mxu0 0
    %123 = vmatpush1.bf16.msra.mxu0 0
    %124 = vmatprep.subr.bf16.mxu0 0
    %125 = vmatpush1.bf16.msra.mxu0 0
    %126 = vmatprep.subr.bf16.mxu0 0
    %127 = vmatpush1.bf16.msra.mxu0 0
    %128 = vmatprep.subr.bf16.mxu0 0
    %129 = vmatpush1.bf16.msra.mxu0 0
    %130 = vmatprep.subr.bf16.mxu0 0
    %131 = vmatpush1.bf16.msra.mxu0 0
    %132 = vmatprep.subr.bf16.mxu0 0
    %133 = vmatpush1.bf16.msra.mxu0 0
    %134 = vmatprep.subr.bf16.mxu0 0
    %135 = vmatpush1.bf16.msra.mxu0 0
    %136 = vmatprep.subr.bf16.mxu0 0
    %137 = vmatpush1.bf16.msra.mxu0 0
    %138 = vmatprep.subr.bf16.mxu0 0
    %139 = vmatpush1.bf16.msra.mxu0 0
    %140 = vmatprep.subr.bf16.mxu0 0
    %141 = vmatpush1.bf16.msra.mxu0 0
    %142 = vmatprep.subr.bf16.mxu0 0
    %143 = vmatpush1.bf16.msra.mxu0 0
    %144 = vmatprep.subr.bf16.mxu0 0
    %145 = vmatpush1.bf16.msra.mxu0 0
    %146 = vmatprep.mubr.bf16.mxu0 0
    %147 = vmatmul.mubr.bf16.gmra.mrb[0].mxu0 %v112
    %v148 = vpop.f32.mrb[0].mxu0
    %v149 = vadd.f32 %v103, %v148
    %v150 = vpop.f32.mrb[0].mxu0
    %v151 = vpop.f32.mrb[0].mxu0
    %v152 = vadd.f32 %v103, %v151
    %v153 = vpop.f32.mrb[0].mxu0
    %154 = vdwg.mxu0
    %v155 = vmax.f32 %v149, 0.0
    %v156 = vmax.f32 %v152, 0.0
    %157 = vst [vmem:[#allocation2] sm:$0xff] %v155
    %158 = vst [vmem:[#allocation2 + $0x8] sm:$0xff] %v156
    %159 = vmatprep.subr.bf16.mxu0 0
    %160 = vmatpush1.bf16.msra.mxu0 %v98
    %161 = vmatprep.subr.bf16.mxu0 0
    %162 = vmatpush1.bf16.msra.mxu0 0
    %163 = vmatprep.subr.bf16.mxu0 0
    %164 = vmatpush1.bf16.msra.mxu0 0
    %165 = vmatprep.subr.bf16.mxu0 0
    %166 = vmatpush1.bf16.msra.mxu0 0
    %167 = vmatprep.subr.bf16.mxu0 0
    %168 = vmatpush1.bf16.msra.mxu0 0
    %169 = vmatprep.subr.bf16.mxu0 0
    %170 = vmatpush1.bf16.msra.mxu0 0
    %171 = vmatprep.subr.bf16.mxu0 0
    %172 = vmatpush1.bf16.msra.mxu0 0
    %173 = vmatprep.subr.bf16.mxu0 0
    %174 = vmatpush1.bf16.msra.mxu0 0
    %175 = vmatprep.subr.bf16.mxu0 0
    %176 = vmatpush1.bf16.msra.mxu0 0
    %177 = vmatprep.subr.bf16.mxu0 0
    %178 = vmatpush1.bf16.msra.mxu0 0
    %179 = vmatprep.subr.bf16.mxu0 0
    %180 = vmatpush1.bf16.msra.mxu0 0
    %181 = vmatprep.subr.bf16.mxu0 0
    %182 = vmatpush1.bf16.msra.mxu0 0
    %183 = vmatprep.subr.bf16.mxu0 0
    %184 = vmatpush1.bf16.msra.mxu0 0
    %185 = vmatprep.subr.bf16.mxu0 0
    %186 = vmatpush1.bf16.msra.mxu0 0
    %187 = vmatprep.subr.bf16.mxu0 0
    %188 = vmatpush1.bf16.msra.mxu0 0
    %189 = vmatprep.subr.bf16.mxu0 0
    %190 = vmatpush1.bf16.msra.mxu0 0
    %191 = vmatprep.mubr.bf16.mxu0 0
    %192 = vmatmul.mubr.bf16.gmra.mrb[0].mxu0 %v112
    %v193 = vpop.f32.mrb[0].mxu0
    %v194 = vadd.f32 %v103, %v193
    %v195 = vpop.f32.mrb[0].mxu0
    %v196 = vpop.f32.mrb[0].mxu0
    %v197 = vadd.f32 %v103, %v196
    %v198 = vpop.f32.mrb[0].mxu0
    %199 = vdwg.mxu0
    %v200 = vmax.f32 %v194, 0.0
    %v201 = vmax.f32 %v197, 0.0
    %s202 = scalar_lea.vmem [#allocation2], 16
    %203 = vst [vmem:[%s202] sm:$0xff] %v200
    %204 = vst [vmem:[%s202 + $0x8] sm:$0xff] %v201
    // Predicated region
    $region18: #{tpu_custom_call.1} parent=1 // pred_check
      _
    $region19: #{tpu_custom_call.1} parent=1 // pred_check_branch
      %206 = sbr.rel (0) target = $region21
    $region20: #{tpu_custom_call.1} parent=1 // pred_region
      %s208 = ssub.s32 512, 512
      %209 = vsyncadd [#allocation3], %s208
      %s210 = sshll.u32 [#allocation2], 4
      %s211 = int_to_ptr.vmem [resolvable:$true] %s210
      %216 = dma.vmem_to_hbm [thread:$0]  %s211, 512, %s4, [#allocation3], 128, 128, 8
    $region21: #{tpu_custom_call.1} parent=1 // pred_fallthru
      _
    // Predicated region
    $region22: #{tpu_custom_call.1} parent=1 // pred_check
      _
    $region23: #{tpu_custom_call.1} parent=1 // pred_check_branch
      %218 = sbr.rel (0) target = $region25
    $region24: #{tpu_custom_call.1} parent=1 // pred_region
      %219 = dma.done [#allocation3], 512
    $region25: #{tpu_custom_call.1} parent=1 // pred_fallthru
      _
    %220 = vsyncpa [#allocation3], 1

</llo_original>
